<compile_context>
chip_gen: v5e
topology: v5e:2x2
jax: 0.10.0
libtpu: 0.0.40
codegen_flags: <defaults>
</compile_context>

<pallas_src>
import functools
import math

import jax
import jax.numpy as jnp
from jax import lax
from jax.experimental import pallas as pl
from jax.experimental.pallas import tpu as pltpu


def _cross_attn_kernel(hs_ref, enc_ref, wq_ref, wk_ref, wv_ref, out_ref,
                       k_scr, v_scr, q_scr, o_scr,
                       *, num_heads, head_dim, scale):
    # hs_ref:  (1, TQ,  H)   query-side hidden states (compute dtype)
    # enc_ref: (1, Skv, H)   encoder hidden states    (compute dtype)
    # w*_ref:  (H, H)        projection weights, [in, out] layout
    # out_ref: (1, TQ,  H)
    # k_scr/v_scr: (nh, Skv, hd)  per-batch cached K/V heads (compute dtype)
    # q_scr:       (nh, TQ,  hd)  head-batched Q for this q-block
    # o_scr:       (TQ, H) f32    full-width context accumulator

    # --- K/V projections: once per batch element, reused across q-blocks. ---
    @pl.when(pl.program_id(1) == 0)
    def _project_kv():
        enc = enc_ref[0]                                            # (Skv, H)
        k = jnp.dot(enc, wk_ref[...], preferred_element_type=jnp.float32)
        v = jnp.dot(enc, wv_ref[...], preferred_element_type=jnp.float32)
        # Head split done once per batch element (amortized over all q-blocks).
        for h in range(num_heads):
            lo = h * head_dim
            k_scr[h] = k[:, lo:lo + head_dim].astype(k_scr.dtype)
            v_scr[h] = v[:, lo:lo + head_dim].astype(v_scr.dtype)

    # --- Q projection; fold 1/sqrt(head_dim) into Q once over (TQ, H). ---
    hs = hs_ref[0]                                                  # (TQ, H)
    q = jnp.dot(hs, wq_ref[...], preferred_element_type=jnp.float32) * scale
    for h in range(num_heads):
        lo = h * head_dim
        q_scr[h] = q[:, lo:lo + head_dim].astype(q_scr.dtype)

    # --- Head-batched attention: batch dim = heads, no explicit k.T. ---
    # scores[h, t, s] = sum_d q[h, t, d] * k[h, s, d]
    scores = lax.dot_general(
        q_scr[...], k_scr[...],
        dimension_numbers=(((2,), (2,)), ((0,), (0,))),
        preferred_element_type=jnp.float32)                         # (nh, TQ, Skv)

    # Numerically-stable softmax, all elementwise math in f32 (v5e-safe).
    scores = scores - jnp.max(scores, axis=-1, keepdims=True)
    probs = jnp.exp(scores)
    denom = jnp.sum(probs, axis=-1, keepdims=True)
    probs = probs * pl.reciprocal(denom, approx=True)               # EUP, not VALU div

    # ctx[h, t, d] = sum_s probs[h, t, s] * v[h, s, d]
    ctx = lax.dot_general(
        probs.astype(v_scr.dtype), v_scr[...],
        dimension_numbers=(((2,), (1,)), ((0,), (0,))),
        preferred_element_type=jnp.float32)                         # (nh, TQ, hd)

    # --- Merge heads into a full-width accumulator; ONE lane-dense store. ---
    for h in range(num_heads):
        lo = h * head_dim
        o_scr[:, lo:lo + head_dim] = ctx[h]
    out_ref[0] = o_scr[...].astype(out_ref.dtype)


def _pick_q_block(sq):
    # Largest power-of-two q-tile (<= 512) that divides Sq, else the full Sq.
    for cand in (512, 256, 128, 64, 32, 16, 8):
        if sq % cand == 0:
            return cand
    return sq


def diffmamba_cross_attention(hidden_states, encoder_hidden_states,
                              wq, wk, wv, num_heads, *,
                              compute_dtype=jnp.bfloat16, q_block_size=None):
    """hidden_states: (B, Sq, H); encoder_hidden_states: (B, Skv, H);
    wq/wk/wv: (H, H) in [in, out] layout. Returns (B, Sq, H) in the input dtype.

    compute_dtype is the MXU operand dtype (bf16 default); accumulation and
    softmax are always f32.
    """
    B, Sq, H = hidden_states.shape
    Be, Skv, He = encoder_hidden_states.shape
    if H % num_heads != 0:
        raise ValueError(f"hidden size {H} not a multiple of num_heads {num_heads}")
    if Be != B or He != H:
        raise ValueError("encoder_hidden_states shape mismatch")
    head_dim = H // num_heads

    tq = q_block_size if q_block_size is not None else _pick_q_block(Sq)
    if Sq % tq != 0:
        raise ValueError(f"Sq={Sq} not divisible by q_block_size={tq}")
    n_q_blocks = Sq // tq

    out_dtype = hidden_states.dtype
    hs = hidden_states.astype(compute_dtype)
    enc = encoder_hidden_states.astype(compute_dtype)
    wq_c = wq.astype(compute_dtype)
    wk_c = wk.astype(compute_dtype)
    wv_c = wv.astype(compute_dtype)

    kernel = functools.partial(
        _cross_attn_kernel, num_heads=num_heads, head_dim=head_dim,
        scale=1.0 / math.sqrt(head_dim))

    # Advisory cost hint so XLA schedules around the custom call sensibly.
    in_bytes = (B * Sq * H + B * Skv * H + 3 * H * H) * jnp.dtype(compute_dtype).itemsize
    out_bytes = B * Sq * H * jnp.dtype(out_dtype).itemsize
    cost = pl.CostEstimate(
        flops=int(2 * B * H * (Sq * H + 2 * Skv * H + 2 * Sq * Skv)),
        transcendentals=int(B * num_heads * Sq * Skv),
        bytes_accessed=int(in_bytes + out_bytes))

    return pl.pallas_call(
        kernel,
        out_shape=jax.ShapeDtypeStruct((B, Sq, H), out_dtype),
        grid_spec=pltpu.PrefetchScalarGridSpec(
            num_scalar_prefetch=0,
            grid=(B, n_q_blocks),
            in_specs=[
                pl.BlockSpec((1, tq, H), lambda b, q: (b, q, 0)),    # hidden_states
                pl.BlockSpec((1, Skv, H), lambda b, q: (b, 0, 0)),   # encoder hs
                pl.BlockSpec((H, H), lambda b, q: (0, 0)),           # Wq
                pl.BlockSpec((H, H), lambda b, q: (0, 0)),           # Wk
                pl.BlockSpec((H, H), lambda b, q: (0, 0)),           # Wv
            ],
            out_specs=pl.BlockSpec((1, tq, H), lambda b, q: (b, q, 0)),
            scratch_shapes=[
                pltpu.VMEM((num_heads, Skv, head_dim), compute_dtype),  # K heads
                pltpu.VMEM((num_heads, Skv, head_dim), compute_dtype),  # V heads
                pltpu.VMEM((num_heads, tq, head_dim), compute_dtype),   # Q heads
                pltpu.VMEM((tq, H), jnp.float32),                       # ctx merge
            ]),
        compiler_params=pltpu.CompilerParams(
            # q-block axis is "arbitrary": K/V scratch is carried across it.
            dimension_semantics=("parallel", "arbitrary")),
        cost_estimate=cost,
    )(hs, enc, wq_c, wk_c, wv_c)


def _reference(hidden_states, encoder_hidden_states, wq, wk, wv, num_heads):
    B, Sq, H = hidden_states.shape
    _, Skv, _ = encoder_hidden_states.shape
    hd = H // num_heads

    def split(x, s):
        return x.reshape(B, s, num_heads, hd).transpose(0, 2, 1, 3)

    q = split(hidden_states @ wq, Sq)
    k = split(encoder_hidden_states @ wk, Skv)
    v = split(encoder_hidden_states @ wv, Skv)
    scores = jnp.einsum("bhqd,bhkd->bhqk", q, k) / math.sqrt(hd)
    probs = jax.nn.softmax(scores, axis=-1)
    ctx = jnp.einsum("bhqk,bhkd->bhqd", probs, v)
    return ctx.transpose(0, 2, 1, 3).reshape(B, Sq, H)


if __name__ == "__main__":
    # Small config consistent with the module:
    #   hidden_size=32, num_attention_heads=4 -> head_dim=8
    B, Sq, Skv, H, NH = 2, 8, 16, 32, 4

    key = jax.random.PRNGKey(0)
    k1, k2, k3, k4, k5 = jax.random.split(key, 5)

    hidden_states = jax.random.normal(k1, (B, Sq, H), dtype=jnp.float32)
    encoder_hidden_states = jax.random.normal(k2, (B, Skv, H), dtype=jnp.float32)

    # Deterministic Linear(H, H, bias=False)-style init; stored [in, out].
    w_scale = 1.0 / math.sqrt(H)
    wq = jax.random.uniform(k3, (H, H), jnp.float32, -w_scale, w_scale)
    wk = jax.random.uniform(k4, (H, H), jnp.float32, -w_scale, w_scale)
    wv = jax.random.uniform(k5, (H, H), jnp.float32, -w_scale, w_scale)

    ref = _reference(hidden_states, encoder_hidden_states, wq, wk, wv, NH)

    # f32 MXU path: tight check (only delta vs reference is the EUP approx
    # reciprocal in the softmax normalization).
    out_f32 = diffmamba_cross_attention(hidden_states, encoder_hidden_states,
                                        wq, wk, wv, NH,
                                        compute_dtype=jnp.float32)
    out_f32 = jax.block_until_ready(out_f32)
    assert out_f32.shape == (B, Sq, H)
    assert jnp.allclose(out_f32, ref, atol=1e-2, rtol=1e-2), "f32 path mismatch"

    # Default bf16-MXU / f32-accumulate path (looser tolerance for bf16 operands).
    out_bf16 = diffmamba_cross_attention(hidden_states, encoder_hidden_states,
                                         wq, wk, wv, NH)
    out_bf16 = jax.block_until_ready(out_bf16)
    assert out_bf16.shape == (B, Sq, H)
    assert out_bf16.dtype == hidden_states.dtype
    assert jnp.allclose(out_bf16, ref, atol=5e-2, rtol=5e-2), "bf16 path mismatch"

    print("KERNEL_OK")
</pallas_src>

<mosaic_0001>
module attributes {stable_mosaic.version = 11 : i64} {
  func.func @_cross_attn_kernel(%arg0: i32, %arg1: i32, %arg2: memref<1x8x32xf32, #tpu.memory_space<vmem>>, %arg3: memref<1x16x32xf32, #tpu.memory_space<vmem>>, %arg4: memref<32x32xf32, #tpu.memory_space<vmem>>, %arg5: memref<32x32xf32, #tpu.memory_space<vmem>>, %arg6: memref<32x32xf32, #tpu.memory_space<vmem>>, %arg7: memref<1x8x32xf32, #tpu.memory_space<vmem>>, %arg8: memref<4x16x8xf32, #tpu.memory_space<vmem>>, %arg9: memref<4x16x8xf32, #tpu.memory_space<vmem>>, %arg10: memref<4x8x8xf32, #tpu.memory_space<vmem>>, %arg11: memref<8x32xf32, #tpu.memory_space<vmem>>) attributes {dimension_semantics = [#tpu.dimension_semantics<parallel>, #tpu.dimension_semantics<arbitrary>], iteration_bounds = array<i64: 2, 1>, scalar_prefetch = 0 : i64, scratch_operands = 4 : i64, tpu.core_type = #tpu.core_type<tc>, window_params = [{transform_indices = @transform_0, window_bounds = array<i64: 1, 8, 32>}, {transform_indices = @transform_1, window_bounds = array<i64: 1, 16, 32>}, {pipeline_mode = #tpu.pipeline_mode<synchronous>, transform_indices = @transform_2, window_bounds = array<i64: 32, 32>}, {pipeline_mode = #tpu.pipeline_mode<synchronous>, transform_indices = @transform_3, window_bounds = array<i64: 32, 32>}, {pipeline_mode = #tpu.pipeline_mode<synchronous>, transform_indices = @transform_4, window_bounds = array<i64: 32, 32>}, {transform_indices = @transform_5, window_bounds = array<i64: 1, 8, 32>}]} {
    %c0_i32 = arith.constant 0 : i32
    %0 = arith.cmpi eq, %arg1, %c0_i32 : i32
    %1 = arith.extui %0 : i1 to i32
    %c0_i32_0 = arith.constant 0 : i32
    %2 = arith.cmpi ne, %1, %c0_i32_0 : i32
    scf.if %2 {
      %c0_38 = arith.constant 0 : index
      %c0_39 = arith.constant 0 : index
      %c0_40 = arith.constant 0 : index
      %56 = vector.load %arg3[%c0_38, %c0_39, %c0_40] : memref<1x16x32xf32, #tpu.memory_space<vmem>>, vector<1x16x32xf32>
      %57 = vector.shape_cast %56 : vector<1x16x32xf32> to vector<16x32xf32>
      %c0_41 = arith.constant 0 : index
      %c0_42 = arith.constant 0 : index
      %58 = vector.load %arg5[%c0_41, %c0_42] : memref<32x32xf32, #tpu.memory_space<vmem>>, vector<32x32xf32>
      %cst_43 = arith.constant dense<0.000000e+00> : vector<16x32xf32>
      %59 = tpu.matmul %57, %58, %cst_43 {dimension_numbers = #tpu.dot_dimension_numbers<[1], [0], [0], [1], [0, 0, 1, 1], [], []>} : vector<16x32xf32>, vector<32x32xf32>, vector<16x32xf32> -> vector<16x32xf32>
      %c0_44 = arith.constant 0 : index
      %c0_45 = arith.constant 0 : index
      %60 = vector.load %arg6[%c0_44, %c0_45] : memref<32x32xf32, #tpu.memory_space<vmem>>, vector<32x32xf32>
      %cst_46 = arith.constant dense<0.000000e+00> : vector<16x32xf32>
      %61 = tpu.matmul %57, %60, %cst_46 {dimension_numbers = #tpu.dot_dimension_numbers<[1], [0], [0], [1], [0, 0, 1, 1], [], []>} : vector<16x32xf32>, vector<32x32xf32>, vector<16x32xf32> -> vector<16x32xf32>
      %62 = vector.extract_strided_slice %59 {offsets = [0, 0], sizes = [16, 8], strides = [1, 1]} : vector<16x32xf32> to vector<16x8xf32>
      %c0_47 = arith.constant 0 : index
      %c0_48 = arith.constant 0 : index
      %c0_49 = arith.constant 0 : index
      %63 = vector.load %arg8[%c0_47, %c0_48, %c0_49] : memref<4x16x8xf32, #tpu.memory_space<vmem>>, vector<1x16x8xf32>
      %64 = vector.shape_cast %63 : vector<1x16x8xf32> to vector<16x8xf32>
      %65 = vector.shape_cast %62 : vector<16x8xf32> to vector<1x16x8xf32>
      tpu.vector_store %arg8[%c0_47, %c0_48, %c0_49], %65 {strides = array<i32>} : memref<4x16x8xf32, #tpu.memory_space<vmem>>, vector<1x16x8xf32>,
      %66 = vector.extract_strided_slice %61 {offsets = [0, 0], sizes = [16, 8], strides = [1, 1]} : vector<16x32xf32> to vector<16x8xf32>
      %c0_50 = arith.constant 0 : index
      %c0_51 = arith.constant 0 : index
      %c0_52 = arith.constant 0 : index
      %67 = vector.load %arg9[%c0_50, %c0_51, %c0_52] : memref<4x16x8xf32, #tpu.memory_space<vmem>>, vector<1x16x8xf32>
      %68 = vector.shape_cast %67 : vector<1x16x8xf32> to vector<16x8xf32>
      %69 = vector.shape_cast %66 : vector<16x8xf32> to vector<1x16x8xf32>
      tpu.vector_store %arg9[%c0_50, %c0_51, %c0_52], %69 {strides = array<i32>} : memref<4x16x8xf32, #tpu.memory_space<vmem>>, vector<1x16x8xf32>,
      %70 = vector.extract_strided_slice %59 {offsets = [0, 8], sizes = [16, 8], strides = [1, 1]} : vector<16x32xf32> to vector<16x8xf32>
      %c1_53 = arith.constant 1 : index
      %c0_54 = arith.constant 0 : index
      %c0_55 = arith.constant 0 : index
      %71 = vector.load %arg8[%c1_53, %c0_54, %c0_55] : memref<4x16x8xf32, #tpu.memory_space<vmem>>, vector<1x16x8xf32>
      %72 = vector.shape_cast %71 : vector<1x16x8xf32> to vector<16x8xf32>
      %73 = vector.shape_cast %70 : vector<16x8xf32> to vector<1x16x8xf32>
      tpu.vector_store %arg8[%c1_53, %c0_54, %c0_55], %73 {strides = array<i32>} : memref<4x16x8xf32, #tpu.memory_space<vmem>>, vector<1x16x8xf32>,
      %74 = vector.extract_strided_slice %61 {offsets = [0, 8], sizes = [16, 8], strides = [1, 1]} : vector<16x32xf32> to vector<16x8xf32>
      %c1_56 = arith.constant 1 : index
      %c0_57 = arith.constant 0 : index
      %c0_58 = arith.constant 0 : index
      %75 = vector.load %arg9[%c1_56, %c0_57, %c0_58] : memref<4x16x8xf32, #tpu.memory_space<vmem>>, vector<1x16x8xf32>
      %76 = vector.shape_cast %75 : vector<1x16x8xf32> to vector<16x8xf32>
      %77 = vector.shape_cast %74 : vector<16x8xf32> to vector<1x16x8xf32>
      tpu.vector_store %arg9[%c1_56, %c0_57, %c0_58], %77 {strides = array<i32>} : memref<4x16x8xf32, #tpu.memory_space<vmem>>, vector<1x16x8xf32>,
      %78 = vector.extract_strided_slice %59 {offsets = [0, 16], sizes = [16, 8], strides = [1, 1]} : vector<16x32xf32> to vector<16x8xf32>
      %c2_59 = arith.constant 2 : index
      %c0_60 = arith.constant 0 : index
      %c0_61 = arith.constant 0 : index
      %79 = vector.load %arg8[%c2_59, %c0_60, %c0_61] : memref<4x16x8xf32, #tpu.memory_space<vmem>>, vector<1x16x8xf32>
      %80 = vector.shape_cast %79 : vector<1x16x8xf32> to vector<16x8xf32>
      %81 = vector.shape_cast %78 : vector<16x8xf32> to vector<1x16x8xf32>
      tpu.vector_store %arg8[%c2_59, %c0_60, %c0_61], %81 {strides = array<i32>} : memref<4x16x8xf32, #tpu.memory_space<vmem>>, vector<1x16x8xf32>,
      %82 = vector.extract_strided_slice %61 {offsets = [0, 16], sizes = [16, 8], strides = [1, 1]} : vector<16x32xf32> to vector<16x8xf32>
      %c2_62 = arith.constant 2 : index
      %c0_63 = arith.constant 0 : index
      %c0_64 = arith.constant 0 : index
      %83 = vector.load %arg9[%c2_62, %c0_63, %c0_64] : memref<4x16x8xf32, #tpu.memory_space<vmem>>, vector<1x16x8xf32>
      %84 = vector.shape_cast %83 : vector<1x16x8xf32> to vector<16x8xf32>
      %85 = vector.shape_cast %82 : vector<16x8xf32> to vector<1x16x8xf32>
      tpu.vector_store %arg9[%c2_62, %c0_63, %c0_64], %85 {strides = array<i32>} : memref<4x16x8xf32, #tpu.memory_space<vmem>>, vector<1x16x8xf32>,
      %86 = vector.extract_strided_slice %59 {offsets = [0, 24], sizes = [16, 8], strides = [1, 1]} : vector<16x32xf32> to vector<16x8xf32>
      %c3_65 = arith.constant 3 : index
      %c0_66 = arith.constant 0 : index
      %c0_67 = arith.constant 0 : index
      %87 = vector.load %arg8[%c3_65, %c0_66, %c0_67] : memref<4x16x8xf32, #tpu.memory_space<vmem>>, vector<1x16x8xf32>
      %88 = vector.shape_cast %87 : vector<1x16x8xf32> to vector<16x8xf32>
      %89 = vector.shape_cast %86 : vector<16x8xf32> to vector<1x16x8xf32>
      tpu.vector_store %arg8[%c3_65, %c0_66, %c0_67], %89 {strides = array<i32>} : memref<4x16x8xf32, #tpu.memory_space<vmem>>, vector<1x16x8xf32>,
      %90 = vector.extract_strided_slice %61 {offsets = [0, 24], sizes = [16, 8], strides = [1, 1]} : vector<16x32xf32> to vector<16x8xf32>
      %c3_68 = arith.constant 3 : index
      %c0_69 = arith.constant 0 : index
      %c0_70 = arith.constant 0 : index
      %91 = vector.load %arg9[%c3_68, %c0_69, %c0_70] : memref<4x16x8xf32, #tpu.memory_space<vmem>>, vector<1x16x8xf32>
      %92 = vector.shape_cast %91 : vector<1x16x8xf32> to vector<16x8xf32>
      %93 = vector.shape_cast %90 : vector<16x8xf32> to vector<1x16x8xf32>
      tpu.vector_store %arg9[%c3_68, %c0_69, %c0_70], %93 {strides = array<i32>} : memref<4x16x8xf32, #tpu.memory_space<vmem>>, vector<1x16x8xf32>,
    } else {
    }
    %c0 = arith.constant 0 : index
    %c0_1 = arith.constant 0 : index
    %c0_2 = arith.constant 0 : index
    %3 = vector.load %arg2[%c0, %c0_1, %c0_2] : memref<1x8x32xf32, #tpu.memory_space<vmem>>, vector<1x8x32xf32>
    %4 = vector.shape_cast %3 : vector<1x8x32xf32> to vector<8x32xf32>
    %c0_3 = arith.constant 0 : index
    %c0_4 = arith.constant 0 : index
    %5 = vector.load %arg4[%c0_3, %c0_4] : memref<32x32xf32, #tpu.memory_space<vmem>>, vector<32x32xf32>
    %cst = arith.constant dense<0.000000e+00> : vector<8x32xf32>
    %6 = tpu.matmul %4, %5, %cst {dimension_numbers = #tpu.dot_dimension_numbers<[1], [0], [0], [1], [0, 0, 1, 1], [], []>} : vector<8x32xf32>, vector<32x32xf32>, vector<8x32xf32> -> vector<8x32xf32>
    %cst_5 = arith.constant 0.353553385 : f32
    %7 = vector.broadcast %cst_5 : f32 to vector<8x32xf32>
    %8 = arith.mulf %6, %7 : vector<8x32xf32>
    %9 = vector.extract_strided_slice %8 {offsets = [0, 0], sizes = [8, 8], strides = [1, 1]} : vector<8x32xf32> to vector<8x8xf32>
    %c0_6 = arith.constant 0 : index
    %c0_7 = arith.constant 0 : index
    %c0_8 = arith.constant 0 : index
    %10 = vector.load %arg10[%c0_6, %c0_7, %c0_8] : memref<4x8x8xf32, #tpu.memory_space<vmem>>, vector<1x8x8xf32>
    %11 = vector.shape_cast %10 : vector<1x8x8xf32> to vector<8x8xf32>
    %12 = vector.shape_cast %9 : vector<8x8xf32> to vector<1x8x8xf32>
    tpu.vector_store %arg10[%c0_6, %c0_7, %c0_8], %12 {strides = array<i32>} : memref<4x8x8xf32, #tpu.memory_space<vmem>>, vector<1x8x8xf32>,
    %13 = vector.extract_strided_slice %8 {offsets = [0, 8], sizes = [8, 8], strides = [1, 1]} : vector<8x32xf32> to vector<8x8xf32>
    %c1 = arith.constant 1 : index
    %c0_9 = arith.constant 0 : index
    %c0_10 = arith.constant 0 : index
    %14 = vector.load %arg10[%c1, %c0_9, %c0_10] : memref<4x8x8xf32, #tpu.memory_space<vmem>>, vector<1x8x8xf32>
    %15 = vector.shape_cast %14 : vector<1x8x8xf32> to vector<8x8xf32>
    %16 = vector.shape_cast %13 : vector<8x8xf32> to vector<1x8x8xf32>
    tpu.vector_store %arg10[%c1, %c0_9, %c0_10], %16 {strides = array<i32>} : memref<4x8x8xf32, #tpu.memory_space<vmem>>, vector<1x8x8xf32>,
    %17 = vector.extract_strided_slice %8 {offsets = [0, 16], sizes = [8, 8], strides = [1, 1]} : vector<8x32xf32> to vector<8x8xf32>
    %c2 = arith.constant 2 : index
    %c0_11 = arith.constant 0 : index
    %c0_12 = arith.constant 0 : index
    %18 = vector.load %arg10[%c2, %c0_11, %c0_12] : memref<4x8x8xf32, #tpu.memory_space<vmem>>, vector<1x8x8xf32>
    %19 = vector.shape_cast %18 : vector<1x8x8xf32> to vector<8x8xf32>
    %20 = vector.shape_cast %17 : vector<8x8xf32> to vector<1x8x8xf32>
    tpu.vector_store %arg10[%c2, %c0_11, %c0_12], %20 {strides = array<i32>} : memref<4x8x8xf32, #tpu.memory_space<vmem>>, vector<1x8x8xf32>,
    %21 = vector.extract_strided_slice %8 {offsets = [0, 24], sizes = [8, 8], strides = [1, 1]} : vector<8x32xf32> to vector<8x8xf32>
    %c3 = arith.constant 3 : index
    %c0_13 = arith.constant 0 : index
    %c0_14 = arith.constant 0 : index
    %22 = vector.load %arg10[%c3, %c0_13, %c0_14] : memref<4x8x8xf32, #tpu.memory_space<vmem>>, vector<1x8x8xf32>
    %23 = vector.shape_cast %22 : vector<1x8x8xf32> to vector<8x8xf32>
    %24 = vector.shape_cast %21 : vector<8x8xf32> to vector<1x8x8xf32>
    tpu.vector_store %arg10[%c3, %c0_13, %c0_14], %24 {strides = array<i32>} : memref<4x8x8xf32, #tpu.memory_space<vmem>>, vector<1x8x8xf32>,
    %c0_15 = arith.constant 0 : index
    %c0_16 = arith.constant 0 : index
    %c0_17 = arith.constant 0 : index
    %25 = vector.load %arg10[%c0_15, %c0_16, %c0_17] : memref<4x8x8xf32, #tpu.memory_space<vmem>>, vector<4x8x8xf32>
    %c0_18 = arith.constant 0 : index
    %c0_19 = arith.constant 0 : index
    %c0_20 = arith.constant 0 : index
    %26 = vector.load %arg8[%c0_18, %c0_19, %c0_20] : memref<4x16x8xf32, #tpu.memory_space<vmem>>, vector<4x16x8xf32>
    %cst_21 = arith.constant dense<0.000000e+00> : vector<4x8x16xf32>
    %27 = tpu.matmul %25, %26, %cst_21 {dimension_numbers = #tpu.dot_dimension_numbers<[2], [2], [1], [1], [0, 0, 0, 1, 1, 1], [0], [0]>} : vector<4x8x8xf32>, vector<4x16x8xf32>, vector<4x8x16xf32> -> vector<4x8x16xf32>
    %cst_22 = arith.constant dense<0xFF800000> : vector<4x8xf32>
    %28 = vector.multi_reduction <maximumf>, %27, %cst_22 [2] : vector<4x8x16xf32> to vector<4x8xf32>
    %29 = vector.shape_cast %28 : vector<4x8xf32> to vector<4x8x1xf32>
    %30 = vector.broadcast %29 : vector<4x8x1xf32> to vector<4x8x16xf32>
    %31 = arith.subf %27, %30 : vector<4x8x16xf32>
    %32 = math.exp %31 : vector<4x8x16xf32>
    %cst_23 = arith.constant dense<0.000000e+00> : vector<4x8xf32>
    %33 = vector.multi_reduction <add>, %32, %cst_23 [2] : vector<4x8x16xf32> to vector<4x8xf32>
    %34 = vector.shape_cast %33 : vector<4x8xf32> to vector<4x8x1xf32>
    %35 = tpu.reciprocal %34 {approx = true} : vector<4x8x1xf32> -> vector<4x8x1xf32>
    %36 = vector.broadcast %35 : vector<4x8x1xf32> to vector<4x8x16xf32>
    %37 = arith.mulf %32, %36 : vector<4x8x16xf32>
    %c0_24 = arith.constant 0 : index
    %c0_25 = arith.constant 0 : index
    %c0_26 = arith.constant 0 : index
    %38 = vector.load %arg9[%c0_24, %c0_25, %c0_26] : memref<4x16x8xf32, #tpu.memory_space<vmem>>, vector<4x16x8xf32>
    %cst_27 = arith.constant dense<0.000000e+00> : vector<4x8x8xf32>
    %39 = tpu.matmul %37, %38, %cst_27 {dimension_numbers = #tpu.dot_dimension_numbers<[2], [1], [1], [2], [0, 0, 0, 1, 1, 2], [0], [0]>} : vector<4x8x16xf32>, vector<4x16x8xf32>, vector<4x8x8xf32> -> vector<4x8x8xf32>
    %40 = vector.extract_strided_slice %39 {offsets = [0, 0, 0], sizes = [1, 8, 8], strides = [1, 1, 1]} : vector<4x8x8xf32> to vector<1x8x8xf32>
    %41 = vector.shape_cast %40 : vector<1x8x8xf32> to vector<8x8xf32>
    %c0_28 = arith.constant 0 : index
    %c0_29 = arith.constant 0 : index
    %42 = vector.load %arg11[%c0_28, %c0_29] : memref<8x32xf32, #tpu.memory_space<vmem>>, vector<8x8xf32>
    tpu.vector_store %arg11[%c0_28, %c0_29], %41 {strides = array<i32>} : memref<8x32xf32, #tpu.memory_space<vmem>>, vector<8x8xf32>,
    %43 = vector.extract_strided_slice %39 {offsets = [1, 0, 0], sizes = [1, 8, 8], strides = [1, 1, 1]} : vector<4x8x8xf32> to vector<1x8x8xf32>
    %44 = vector.shape_cast %43 : vector<1x8x8xf32> to vector<8x8xf32>
    %c0_30 = arith.constant 0 : index
    %c8 = arith.constant 8 : index
    %45 = vector.load %arg11[%c0_30, %c8] : memref<8x32xf32, #tpu.memory_space<vmem>>, vector<8x8xf32>
    tpu.vector_store %arg11[%c0_30, %c8], %44 {strides = array<i32>} : memref<8x32xf32, #tpu.memory_space<vmem>>, vector<8x8xf32>,
    %46 = vector.extract_strided_slice %39 {offsets = [2, 0, 0], sizes = [1, 8, 8], strides = [1, 1, 1]} : vector<4x8x8xf32> to vector<1x8x8xf32>
    %47 = vector.shape_cast %46 : vector<1x8x8xf32> to vector<8x8xf32>
    %c0_31 = arith.constant 0 : index
    %c16 = arith.constant 16 : index
    %48 = vector.load %arg11[%c0_31, %c16] : memref<8x32xf32, #tpu.memory_space<vmem>>, vector<8x8xf32>
    tpu.vector_store %arg11[%c0_31, %c16], %47 {strides = array<i32>} : memref<8x32xf32, #tpu.memory_space<vmem>>, vector<8x8xf32>,
    %49 = vector.extract_strided_slice %39 {offsets = [3, 0, 0], sizes = [1, 8, 8], strides = [1, 1, 1]} : vector<4x8x8xf32> to vector<1x8x8xf32>
    %50 = vector.shape_cast %49 : vector<1x8x8xf32> to vector<8x8xf32>
    %c0_32 = arith.constant 0 : index
    %c24 = arith.constant 24 : index
    %51 = vector.load %arg11[%c0_32, %c24] : memref<8x32xf32, #tpu.memory_space<vmem>>, vector<8x8xf32>
    tpu.vector_store %arg11[%c0_32, %c24], %50 {strides = array<i32>} : memref<8x32xf32, #tpu.memory_space<vmem>>, vector<8x8xf32>,
    %c0_33 = arith.constant 0 : index
    %c0_34 = arith.constant 0 : index
    %52 = vector.load %arg11[%c0_33, %c0_34] : memref<8x32xf32, #tpu.memory_space<vmem>>, vector<8x32xf32>
    %c0_35 = arith.constant 0 : index
    %c0_36 = arith.constant 0 : index
    %c0_37 = arith.constant 0 : index
    %53 = vector.load %arg7[%c0_35, %c0_36, %c0_37] : memref<1x8x32xf32, #tpu.memory_space<vmem>>, vector<1x8x32xf32>
    %54 = vector.shape_cast %53 : vector<1x8x32xf32> to vector<8x32xf32>
    %55 = vector.shape_cast %52 : vector<8x32xf32> to vector<1x8x32xf32>
    tpu.vector_store %arg7[%c0_35, %c0_36, %c0_37], %55 {strides = array<i32>} : memref<1x8x32xf32, #tpu.memory_space<vmem>>, vector<1x8x32xf32>,
    return
  }
  func.func @transform_0(%arg0: i32, %arg1: i32) -> (i32, i32, i32) {
    %c0_i32 = arith.constant 0 : i32
    %c0_i32_0 = arith.constant 0 : i32
    return %arg0, %arg1, %c0_i32 : i32, i32, i32
  }
  func.func @transform_1(%arg0: i32, %arg1: i32) -> (i32, i32, i32) {
    %c0_i32 = arith.constant 0 : i32
    %c0_i32_0 = arith.constant 0 : i32
    %c0_i32_1 = arith.constant 0 : i32
    return %arg0, %c0_i32, %c0_i32_0 : i32, i32, i32
  }
  func.func @transform_2(%arg0: i32, %arg1: i32) -> (i32, i32) {
    %c0_i32 = arith.constant 0 : i32
    %c0_i32_0 = arith.constant 0 : i32
    %c0_i32_1 = arith.constant 0 : i32
    return %c0_i32, %c0_i32_0 : i32, i32
  }
  func.func @transform_3(%arg0: i32, %arg1: i32) -> (i32, i32) {
    %c0_i32 = arith.constant 0 : i32
    %c0_i32_0 = arith.constant 0 : i32
    %c0_i32_1 = arith.constant 0 : i32
    return %c0_i32, %c0_i32_0 : i32, i32
  }
  func.func @transform_4(%arg0: i32, %arg1: i32) -> (i32, i32) {
    %c0_i32 = arith.constant 0 : i32
    %c0_i32_0 = arith.constant 0 : i32
    %c0_i32_1 = arith.constant 0 : i32
    return %c0_i32, %c0_i32_0 : i32, i32
  }
  func.func @transform_5(%arg0: i32, %arg1: i32) -> (i32, i32, i32) {
    %c0_i32 = arith.constant 0 : i32
    %c0_i32_0 = arith.constant 0 : i32
    return %arg0, %arg1, %c0_i32 : i32, i32, i32
  }
}

</mosaic_0001>

<llo_original>
// kernel: tpu_custom_call.1
$region0: #{tpu_custom_call.1}
  #allocation0 [shape = 'u32[]', space=smem, size = 0x4, offset = 0x4, fixed_abs, tag = 'smem constant byte address 0x4 - core index']
  #allocation1 [shape = 'u32[72,128]{1,0:T(1,128)}', space=vmem, size = 0x9000, scoped, tag = 'internal scratch']
  #allocation2 [shape = 'f32[4,16,8]{2,1,0:T(8,128)}', space=vmem, size = 0x8000, scoped, tag = 'scratch operand']
  #allocation3 [shape = 'f32[4,16,8]{2,1,0:T(8,128)}', space=vmem, size = 0x8000, scoped, tag = 'scratch operand']
  #allocation4 [shape = 'f32[4,8,8]{2,1,0:T(8,128)}', space=vmem, size = 0x4000, scoped, tag = 'scratch operand']
  #allocation5 [shape = 'f32[8,32]{1,0:T(8,128)}', space=vmem, size = 0x1000, scoped, tag = 'scratch operand']
  %s0 = inlined_call_operand.hbm [shape: f32[2,8,32], index: 0, kind: input, shape index: {}]
  %s1 = inlined_call_operand.hbm [shape: f32[2,16,32], index: 1, kind: input, shape index: {}]
  %s2 = inlined_call_operand.hbm [shape: f32[32,32], index: 2, kind: input, shape index: {}]
  %s3 = inlined_call_operand.hbm [shape: f32[32,32], index: 3, kind: input, shape index: {}]
  %s4 = inlined_call_operand.hbm [shape: f32[32,32], index: 4, kind: input, shape index: {}]
  %s5 = inlined_call_operand.hbm [shape: f32[2,8,32], index: 5, kind: output, shape index: {}]
  %s6 = sld [smem:[#allocation0]]
  $region77: #{tpu_custom_call.1} parent=0
    _
  %s8 = ssub.s32 1, %s6
  %s9 = scalar_select 0, %s8, %s6
  $region1: #{tpu_custom_call.1} parent=0
    #allocation6 [shape = 'u8[8192]{0}', space=vmem, size = 0x2000, scoped, tag = 'input window, operand 0']
    #allocation7 [shape = 's32[2]{0}', space=sflag, size = 0x8, scoped, tag = 'scoped memory for tpu_custom_call.1']
    #allocation8 [shape = 's32[2]{0}', space=sflag, size = 0x8, scoped, tag = 'scoped memory for tpu_custom_call.1']
    #allocation9 [shape = 'u8[16384]{0}', space=vmem, size = 0x4000, scoped, tag = 'input window, operand 1']
    #allocation10 [shape = 's32[2]{0}', space=sflag, size = 0x8, scoped, tag = 'scoped memory for tpu_custom_call.1']
    #allocation11 [shape = 'u8[16384]{0}', space=vmem, size = 0x4000, scoped, tag = 'input window, operand 2, single buffered']
    #allocation12 [shape = 'u8[16384]{0}', space=vmem, size = 0x4000, scoped, tag = 'input window, operand 3, single buffered']
    #allocation13 [shape = 's32[1]{0}', space=sflag, size = 0x4, scoped, tag = 'scoped memory for tpu_custom_call.1']
    #allocation14 [shape = 'u8[16384]{0}', space=vmem, size = 0x4000, scoped, tag = 'input window, operand 4, single buffered']
    #allocation15 [shape = 'u8[8192]{0}', space=vmem, size = 0x2000, scoped, tag = 'output window, operand 0']
    %10 = vsyncpa [#allocation7], 0
    %s11 = scalar_lea.sflag [#allocation7], 1
    %12 = vsyncpa %s11, 0
    %13 = vsyncpa [#allocation10], 0
    %s14 = scalar_lea.sflag [#allocation10], 1
    %15 = vsyncpa %s14, 0
    %16 = vsyncpa [#allocation13], 0
    %17 = vsyncpa [#allocation8], 0
    %s18 = scalar_lea.sflag [#allocation8], 1
    %19 = vsyncpa %s18, 0
    loop: start=0, step=1, limit=4
    $region2: #{tpu_custom_call.1} parent=1 // loop_pre_header
      _
    $region3: #{tpu_custom_call.1} parent=1 // loop_header
      %s21 = sphi 0, %s25
      %p22 = scmp.ge.s32.totalorder %s21, 4
      %s28 = sphi 0, %s40
      %s29 = sphi 0, %s36
      %s30 = sphi 0, %s28
      %s31 = sphi 0, %s29
      %s32 = sphi 0, %s30
      %s33 = sphi 0, %s31
      %s45 = sphi 0, %s47
      %s48 = sphi 0, %s45
      %s49 = sphi 0, %s48
      %s65 = sphi 0, %s49
      %s71 = sphi 0, %s73
      %s74 = sphi 0, %s71
      %s75 = sphi 0, %s74
      %s91 = sphi 0, %s75
      %s95 = sphi 0, %s95
      %s97 = sphi 0, %s95
      %s98 = sphi 0, %s97
      %s112 = sphi 0, %s98
      %s116 = sphi 0, %s116
      %s118 = sphi 0, %s116
      %s119 = sphi 0, %s118
      %s133 = sphi 0, %s119
      %s137 = sphi 0, %s137
      %s139 = sphi 0, %s137
      %s140 = sphi 0, %s139
      %s154 = sphi 0, %s140
      %s162 = sphi 0, %s164
      %s165 = sphi 0, %s162
      %s166 = sphi 0, %s165
      %s182 = sphi 0, %s166
    $region4: #{tpu_custom_call.1} parent=1 // loop_header_branch
      %24 = sbr.rel (%p22) target = $region8
    $region5: #{tpu_custom_call.1} parent=1 // loop_body
      %s26 = ssub.s32 %s21, 1
      %s27 = ssub.s32 %s21, 2
      %s34 = sadd.s32 1, %s29
      %p35 = scmp.ge.s32.totalorder %s34, 1
      %s36 = scalar_select %p35, 0, %s34
      %s37 = sadd.s32 1, %s28
      %s38 = scalar_select %p35, %s37, %s28
      %p39 = scmp.ge.s32.totalorder %s38, 2
      %s40 = scalar_select %p39, 0, %s38
      %s41 = ssub.s32 %s28, %s40
      %s42 = ssub.s32 %s29, %s36
      %s43 = sor.u32 %s41, %s42
      %p44 = scmp.eq.s32.totalorder %s43, 0
      %s46 = sadd.s32 %s45, 1
      %s47 = scalar_select %p44, %s45, %s46
      %p50 = pneg %p44
      %p51 = scmp.eq.s32.totalorder %s21, 1
      %p52 = por %p50, %p51
      %p53 = scmp.ne.s32.totalorder %s45, %s48
      %p54 = scmp.eq.s32.totalorder %s21, 0
      %p55 = por %p53, %p54
      %p56 = scmp.ne.s32.totalorder %s45, %s48
      %p57 = scmp.eq.s32.totalorder %s26, 1
      %p58 = por %p56, %p57
      %p59 = scmp.ne.s32.totalorder %s48, %s49
      %p60 = scmp.eq.s32.totalorder %s26, 0
      %p61 = por %p59, %p60
      %p62 = scmp.ne.s32.totalorder %s48, %s49
      %p63 = scmp.eq.s32.totalorder %s27, 1
      %p64 = por %p62, %p63
      %p66 = scmp.ne.s32.totalorder %s49, %s65
      %p67 = scmp.eq.s32.totalorder %s27, 0
      %p68 = por %p66, %p67
      %s69 = ssub.s32 %s28, %s40
      %p70 = scmp.eq.s32.totalorder %s69, 0
      %s72 = sadd.s32 %s71, 1
      %s73 = scalar_select %p70, %s71, %s72
      %p76 = pneg %p70
      %p77 = scmp.eq.s32.totalorder %s21, 1
      %p78 = por %p76, %p77
      %p79 = scmp.ne.s32.totalorder %s71, %s74
      %p80 = scmp.eq.s32.totalorder %s21, 0
      %p81 = por %p79, %p80
      %p82 = scmp.ne.s32.totalorder %s71, %s74
      %p83 = scmp.eq.s32.totalorder %s26, 1
      %p84 = por %p82, %p83
      %p85 = scmp.ne.s32.totalorder %s74, %s75
      %p86 = scmp.eq.s32.totalorder %s26, 0
      %p87 = por %p85, %p86
      %p88 = scmp.ne.s32.totalorder %s74, %s75
      %p89 = scmp.eq.s32.totalorder %s27, 1
      %p90 = por %p88, %p89
      %p92 = scmp.ne.s32.totalorder %s75, %s91
      %p93 = scmp.eq.s32.totalorder %s27, 0
      %p94 = por %p92, %p93
      %s96 = sadd.s32 %s95, 1
      %p99 = scmp.eq.s32.totalorder %s21, 1
      %p100 = scmp.ne.s32.totalorder %s95, %s97
      %p101 = scmp.eq.s32.totalorder %s21, 0
      %p102 = por %p100, %p101
      %p103 = scmp.ne.s32.totalorder %s95, %s97
      %p104 = scmp.eq.s32.totalorder %s26, 1
      %p105 = por %p103, %p104
      %p106 = scmp.ne.s32.totalorder %s97, %s98
      %p107 = scmp.eq.s32.totalorder %s26, 0
      %p108 = por %p106, %p107
      %p109 = scmp.ne.s32.totalorder %s97, %s98
      %p110 = scmp.eq.s32.totalorder %s27, 1
      %p111 = por %p109, %p110
      %p113 = scmp.ne.s32.totalorder %s98, %s112
      %p114 = scmp.eq.s32.totalorder %s27, 0
      %p115 = por %p113, %p114
      %s117 = sadd.s32 %s116, 1
      %p120 = scmp.eq.s32.totalorder %s21, 1
      %p121 = scmp.ne.s32.totalorder %s116, %s118
      %p122 = scmp.eq.s32.totalorder %s21, 0
      %p123 = por %p121, %p122
      %p124 = scmp.ne.s32.totalorder %s116, %s118
      %p125 = scmp.eq.s32.totalorder %s26, 1
      %p126 = por %p124, %p125
      %p127 = scmp.ne.s32.totalorder %s118, %s119
      %p128 = scmp.eq.s32.totalorder %s26, 0
      %p129 = por %p127, %p128
      %p130 = scmp.ne.s32.totalorder %s118, %s119
      %p131 = scmp.eq.s32.totalorder %s27, 1
      %p132 = por %p130, %p131
      %p134 = scmp.ne.s32.totalorder %s119, %s133
      %p135 = scmp.eq.s32.totalorder %s27, 0
      %p136 = por %p134, %p135
      %s138 = sadd.s32 %s137, 1
      %p141 = scmp.eq.s32.totalorder %s21, 1
      %p142 = scmp.ne.s32.totalorder %s137, %s139
      %p143 = scmp.eq.s32.totalorder %s21, 0
      %p144 = por %p142, %p143
      %p145 = scmp.ne.s32.totalorder %s137, %s139
      %p146 = scmp.eq.s32.totalorder %s26, 1
      %p147 = por %p145, %p146
      %p148 = scmp.ne.s32.totalorder %s139, %s140
      %p149 = scmp.eq.s32.totalorder %s26, 0
      %p150 = por %p148, %p149
      %p151 = scmp.ne.s32.totalorder %s139, %s140
      %p152 = scmp.eq.s32.totalorder %s27, 1
      %p153 = por %p151, %p152
      %p155 = scmp.ne.s32.totalorder %s140, %s154
      %p156 = scmp.eq.s32.totalorder %s27, 0
      %p157 = por %p155, %p156
      %s158 = ssub.s32 %s28, %s40
      %s159 = ssub.s32 %s29, %s36
      %s160 = sor.u32 %s158, %s159
      %p161 = scmp.eq.s32.totalorder %s160, 0
      %s163 = sadd.s32 %s162, 1
      %s164 = scalar_select %p161, %s162, %s163
      %p167 = pneg %p161
      %p168 = scmp.eq.s32.totalorder %s21, 1
      %p169 = por %p167, %p168
      %p170 = scmp.ne.s32.totalorder %s162, %s165
      %p171 = scmp.eq.s32.totalorder %s21, 0
      %p172 = por %p170, %p171
      %p173 = scmp.ne.s32.totalorder %s162, %s165
      %p174 = scmp.eq.s32.totalorder %s26, 1
      %p175 = por %p173, %p174
      %p176 = scmp.ne.s32.totalorder %s165, %s166
      %p177 = scmp.eq.s32.totalorder %s26, 0
      %p178 = por %p176, %p177
      %p179 = scmp.ne.s32.totalorder %s165, %s166
      %p180 = scmp.eq.s32.totalorder %s27, 1
      %p181 = por %p179, %p180
      %p183 = scmp.ne.s32.totalorder %s166, %s182
      %p184 = scmp.eq.s32.totalorder %s27, 0
      %p185 = por %p183, %p184
      %p186 = scmp.le.s32.totalorder 1, %s21
      %p187 = scmp.lt.s32.totalorder %s21, 3
      %p188 = pnand %p186, %p187
      %p189 = pneg %p188
      // Predicated region
      $region9: #{tpu_custom_call.1} parent=5 // pred_check
        _
      $region10: #{tpu_custom_call.1} parent=5 // pred_check_branch
        %191 = sbr.rel (%p188) target = $region12
      $region11: #{tpu_custom_call.1} parent=5 // pred_region
        %s192 = ssub.s32 %s21, 1
        // Predicated region
        $region13: #{tpu_custom_call.1} parent=11 // pred_check
          %p193 = pneg %p108
        $region14: #{tpu_custom_call.1} parent=11 // pred_check_branch
          %195 = sbr.rel (%p193) target = $region16
        $region15: #{tpu_custom_call.1} parent=11 // pred_region
          %197 = vsyncadd [#allocation10], 0
          %s198 = sshll.u32 %s2, 4
          %s199 = int_to_ptr.hbm [resolvable:$true] %s198
          %s200 = sshll.u32 [#allocation11], 4
          %s201 = int_to_ptr.vmem [resolvable:$true] %s200
          %206 = dma.hbm_to_vmem [thread:$0]  %s199, 512, %s201, [#allocation10], 128, 128, 8
        $region16: #{tpu_custom_call.1} parent=11 // pred_fallthru
          _
        // Predicated region
        $region17: #{tpu_custom_call.1} parent=11 // pred_check
          %p207 = pneg %p129
        $region18: #{tpu_custom_call.1} parent=11 // pred_check_branch
          %209 = sbr.rel (%p207) target = $region20
        $region19: #{tpu_custom_call.1} parent=11 // pred_region
          %211 = vsyncadd [#allocation13], 0
          %s212 = sshll.u32 %s3, 4
          %s213 = int_to_ptr.hbm [resolvable:$true] %s212
          %s214 = sshll.u32 [#allocation12], 4
          %s215 = int_to_ptr.vmem [resolvable:$true] %s214
          %220 = dma.hbm_to_vmem [thread:$0]  %s213, 512, %s215, [#allocation13], 128, 128, 8
        $region20: #{tpu_custom_call.1} parent=11 // pred_fallthru
          _
        // Predicated region
        $region21: #{tpu_custom_call.1} parent=11 // pred_check
          %p221 = pneg %p150
        $region22: #{tpu_custom_call.1} parent=11 // pred_check_branch
          %223 = sbr.rel (%p221) target = $region24
        $region23: #{tpu_custom_call.1} parent=11 // pred_region
          %225 = vsyncadd [#allocation13], 0
          %s226 = sshll.u32 %s4, 4
          %s227 = int_to_ptr.hbm [resolvable:$true] %s226
          %s228 = sshll.u32 [#allocation14], 4
          %s229 = int_to_ptr.vmem [resolvable:$true] %s228
          %234 = dma.hbm_to_vmem [thread:$0]  %s227, 512, %s229, [#allocation13], 128, 128, 8
        $region24: #{tpu_custom_call.1} parent=11 // pred_fallthru
          _
      $region12: #{tpu_custom_call.1} parent=5 // pred_fallthru
        _
      %p235 = scmp.lt.s32.totalorder %s21, 2
      // Predicated region
      $region25: #{tpu_custom_call.1} parent=5 // pred_check
        %p236 = pneg %p235
      $region26: #{tpu_custom_call.1} parent=5 // pred_check_branch
        %238 = sbr.rel (%p236) target = $region28
      $region27: #{tpu_custom_call.1} parent=5 // pred_region
        // Predicated region
        $region29: #{tpu_custom_call.1} parent=27 // pred_check
          %p239 = pneg %p55
        $region30: #{tpu_custom_call.1} parent=27 // pred_check_branch
          %241 = sbr.rel (%p239) target = $region32
        $region31: #{tpu_custom_call.1} parent=27 // pred_region
          %s242 = sand.u32 %s45, 1
          %s243 = scalar_lea.sflag [#allocation7], %s242
          %s244 = sand.u32 %s45, 1
          %s245 = smul.addr %s244, 8
          %s246 = scalar_lea.vmem [#allocation6], %s245
          %248 = vsyncadd %s243, 0
          %s249 = sadd.s32 %s29, %s28
          %s250 = smul.addr %s249, 8
          %s251 = scalar_lea.hbm %s0, %s250
          %s253 = sshll.u32 %s251, 4
          %s254 = int_to_ptr.hbm [resolvable:$true] %s253
          %s255 = sshll.u32 %s246, 4
          %s256 = int_to_ptr.vmem [resolvable:$true] %s255
          %258 = dma.hbm_to_vmem [thread:$0]  %s254, 128, %s256, %s243
        $region32: #{tpu_custom_call.1} parent=27 // pred_fallthru
          _
        // Predicated region
        $region33: #{tpu_custom_call.1} parent=27 // pred_check
          %p259 = pneg %p81
        $region34: #{tpu_custom_call.1} parent=27 // pred_check_branch
          %261 = sbr.rel (%p259) target = $region36
        $region35: #{tpu_custom_call.1} parent=27 // pred_region
          %s262 = sand.u32 %s21, 1
          %s263 = scalar_lea.sflag [#allocation10], %s262
          %s264 = sand.u32 %s71, 1
          %s265 = smul.addr %s264, 16
          %s266 = scalar_lea.vmem [#allocation9], %s265
          %268 = vsyncadd %s263, 0
          %s269 = smul.addr %s28, 2
          %s270 = smul.addr %s269, 8
          %s271 = scalar_lea.hbm %s1, %s270
          %s272 = sshll.u32 %s271, 4
          %s273 = int_to_ptr.hbm [resolvable:$true] %s272
          %s274 = sshll.u32 %s266, 4
          %s275 = int_to_ptr.vmem [resolvable:$true] %s274
          %280 = dma.hbm_to_vmem [thread:$0]  %s273, 256, %s275, %s263, 128, 128, 8
        $region36: #{tpu_custom_call.1} parent=27 // pred_fallthru
          _
      $region28: #{tpu_custom_call.1} parent=5 // pred_fallthru
        _
      %p281 = scmp.le.s32.totalorder 1, %s21
      %p282 = scmp.lt.s32.totalorder %s21, 3
      %p283 = pnand %p281, %p282
      %p284 = pneg %p283
      // Predicated region
      $region37: #{tpu_custom_call.1} parent=5 // pred_check
        _
      $region38: #{tpu_custom_call.1} parent=5 // pred_check_branch
        %286 = sbr.rel (%p283) target = $region40
      $region39: #{tpu_custom_call.1} parent=5 // pred_region
        %s287 = ssub.s32 %s21, 1
        %s288 = sand.u32 %s48, 1
        %s289 = scalar_lea.sflag [#allocation7], %s288
        %s290 = sand.u32 %s48, 1
        %s291 = smul.addr %s290, 8
        %s292 = scalar_lea.vmem [#allocation6], %s291
        // Predicated region
        $region41: #{tpu_custom_call.1} parent=39 // pred_check
          %p293 = pneg %p61
        $region42: #{tpu_custom_call.1} parent=39 // pred_check_branch
          %295 = sbr.rel (%p293) target = $region44
        $region43: #{tpu_custom_call.1} parent=39 // pred_region
          %297 = dma.done %s289, 128
        $region44: #{tpu_custom_call.1} parent=39 // pred_fallthru
          _
        %s298 = sand.u32 %s26, 1
        %s299 = scalar_lea.sflag [#allocation10], %s298
        %s300 = sand.u32 %s74, 1
        %s301 = smul.addr %s300, 16
        %s302 = scalar_lea.vmem [#allocation9], %s301
        // Predicated region
        $region45: #{tpu_custom_call.1} parent=39 // pred_check
          %p303 = pneg %p87
        $region46: #{tpu_custom_call.1} parent=39 // pred_check_branch
          %305 = sbr.rel (%p303) target = $region48
        $region47: #{tpu_custom_call.1} parent=39 // pred_region
          %307 = dma.done %s299, 256
        $region48: #{tpu_custom_call.1} parent=39 // pred_fallthru
          _
        // Predicated region
        $region49: #{tpu_custom_call.1} parent=39 // pred_check
          %p308 = pneg %p108
        $region50: #{tpu_custom_call.1} parent=39 // pred_check_branch
          %310 = sbr.rel (%p308) target = $region52
        $region51: #{tpu_custom_call.1} parent=39 // pred_region
          %312 = dma.done [#allocation10], 512
        $region52: #{tpu_custom_call.1} parent=39 // pred_fallthru
          _
        // Predicated region
        $region53: #{tpu_custom_call.1} parent=39 // pred_check
          %p313 = pneg %p129
        $region54: #{tpu_custom_call.1} parent=39 // pred_check_branch
          %315 = sbr.rel (%p313) target = $region56
        $region55: #{tpu_custom_call.1} parent=39 // pred_region
          %317 = dma.done [#allocation13], 512
        $region56: #{tpu_custom_call.1} parent=39 // pred_fallthru
          _
        // Predicated region
        $region57: #{tpu_custom_call.1} parent=39 // pred_check
          %p318 = pneg %p150
        $region58: #{tpu_custom_call.1} parent=39 // pred_check_branch
          %320 = sbr.rel (%p318) target = $region60
        $region59: #{tpu_custom_call.1} parent=39 // pred_region
          %322 = dma.done [#allocation13], 512
        $region60: #{tpu_custom_call.1} parent=39 // pred_fallthru
          _
        %s323 = sand.u32 %s48, 1
        %s324 = scalar_lea.sflag [#allocation7], %s323
        %s325 = sand.u32 %s48, 1
        %s326 = smul.addr %s325, 8
        %s327 = scalar_lea.vmem [#allocation6], %s326
        %p328 = pneg %p61
        %p329 = pneg %p58
        %s330 = sand.u32 %s26, 1
        %s331 = scalar_lea.sflag [#allocation10], %s330
        %s332 = sand.u32 %s74, 1
        %s333 = smul.addr %s332, 16
        %s334 = scalar_lea.vmem [#allocation9], %s333
        %p335 = pneg %p87
        %p336 = pneg %p84
        %p337 = pneg %p108
        %p338 = pneg %p105
        %p339 = pneg %p129
        %p340 = pneg %p126
        %p341 = pneg %p150
        %p342 = pneg %p147
        %p343 = pneg %p178
        %p344 = pneg %p175
        %s345 = sand.u32 %s165, 1
        %s346 = scalar_lea.sflag [#allocation8], %s345
        %s347 = sand.u32 %s165, 1
        %s348 = smul.addr %s347, 8
        %s349 = scalar_lea.vmem [#allocation15], %s348
        %p350 = scmp.eq.s32.totalorder %s31, 0
        // Predicated region
        $region61: #{tpu_custom_call.1} parent=39 // pred_check
          %p351 = pneg %p350
        $region62: #{tpu_custom_call.1} parent=39 // pred_check_branch
          %353 = sbr.rel (%p351) target = $region64
        $region63: #{tpu_custom_call.1} parent=39 // pred_region
          %v354 = vld [vmem:[%s302] sm:$0xff]
          %v355 = vld [vmem:[%s302 + $0x8] sm:$0xff]
          %v356 = vld [vmem:[#allocation12] sm:$0xff]
          %v357 = vld [vmem:[#allocation12 + $0x8] sm:$0xff]
          %v358 = vld [vmem:[#allocation12 + $0x10] sm:$0xff]
          %v359 = vld [vmem:[#allocation12 + $0x18] sm:$0xff]
          %vm360 = vcmask 261120
          %v362 = vsel %vm360, %v354, 0
          %v365 = vsel %vm360, %v355, 0
          %367 = vmatpush.msra.mxu0 0.0
          %368 = vmatpush.msra.mxu0 0.0
          %369 = vmatpush.msra.mxu0 0.0
          %370 = vmatpush.msra.mxu0 0.0
          %371 = vmatpush.msra.mxu0 0.0
          %372 = vmatpush.msra.mxu0 0.0
          %373 = vmatpush.msra.mxu0 0.0
          %374 = vmatpush.msra.mxu0 0.0
          %375 = vmatpush.msra.mxu0 0.0
          %376 = vmatpush.msra.mxu0 0.0
          %377 = vmatpush.msra.mxu0 0.0
          %378 = vmatpush.msra.mxu0 0.0
          %379 = vmatpush.msra.mxu0 %v359
          %380 = vmatpush.msra.mxu0 %v358
          %381 = vmatpush.msra.mxu0 %v357
          %382 = vmatpush.msra.mxu0 %v356
          %383 = vmatmul.f32.gmra.mxu0 %v362
          %v384 = vpop.f32.mrf.mxu0
          %v385 = vadd.f32 0.0, %v384
          %386 = vmatmul.f32.gmra.mxu0 %v365
          %v387 = vpop.f32.mrf.mxu0
          %v388 = vadd.f32 0.0, %v387
          %389 = vdwg.mxu0
          %v390 = vld [vmem:[#allocation14] sm:$0xff]
          %v391 = vld [vmem:[#allocation14 + $0x8] sm:$0xff]
          %v392 = vld [vmem:[#allocation14 + $0x10] sm:$0xff]
          %v393 = vld [vmem:[#allocation14 + $0x18] sm:$0xff]
          %394 = vmatpush.msra.mxu0 0.0
          %395 = vmatpush.msra.mxu0 0.0
          %396 = vmatpush.msra.mxu0 0.0
          %397 = vmatpush.msra.mxu0 0.0
          %398 = vmatpush.msra.mxu0 0.0
          %399 = vmatpush.msra.mxu0 0.0
          %400 = vmatpush.msra.mxu0 0.0
          %401 = vmatpush.msra.mxu0 0.0
          %402 = vmatpush.msra.mxu0 0.0
          %403 = vmatpush.msra.mxu0 0.0
          %404 = vmatpush.msra.mxu0 0.0
          %405 = vmatpush.msra.mxu0 0.0
          %406 = vmatpush.msra.mxu0 %v393
          %407 = vmatpush.msra.mxu0 %v392
          %408 = vmatpush.msra.mxu0 %v391
          %409 = vmatpush.msra.mxu0 %v390
          %410 = vmatmul.f32.gmra.mxu0 %v362
          %v411 = vpop.f32.mrf.mxu0
          %v412 = vadd.f32 0.0, %v411
          %413 = vmatmul.f32.gmra.mxu0 %v365
          %v414 = vpop.f32.mrf.mxu0
          %v415 = vadd.f32 0.0, %v414
          %416 = vdwg.mxu0
          %vm417 = vcmask 64512
          %418 = vst.msk [vmem:[#allocation2] sm:$0xff] %vm417, %v385
          %419 = vst.msk [vmem:[#allocation2 + $0x8] sm:$0xff] %vm417, %v388
          %420 = vst.msk [vmem:[#allocation3] sm:$0xff] %vm417, %v412
          %421 = vst.msk [vmem:[#allocation3 + $0x8] sm:$0xff] %vm417, %v415
          %424 = vrot.lane.b32.xlu0 %v385, 120
          %v425 = vpop.permute.xlu0 %424
          %426 = vrot.lane.b32.xlu0 %v388, 120
          %v427 = vpop.permute.xlu0 %426
          %s430 = scalar_lea.vmem [#allocation2], 16
          %431 = vst.msk [vmem:[%s430] sm:$0xff] %vm417, %v425
          %432 = vst.msk [vmem:[%s430 + $0x8] sm:$0xff] %vm417, %v427
          %435 = vrot.lane.b32.xlu0 %v412, 120
          %v436 = vpop.permute.xlu0 %435
          %437 = vrot.lane.b32.xlu0 %v415, 120
          %v438 = vpop.permute.xlu0 %437
          %s441 = scalar_lea.vmem [#allocation3], 16
          %442 = vst.msk [vmem:[%s441] sm:$0xff] %vm417, %v436
          %443 = vst.msk [vmem:[%s441 + $0x8] sm:$0xff] %vm417, %v438
          %444 = vrot.lane.b32.xlu0 %v385, 112
          %v445 = vpop.permute.xlu0 %444
          %446 = vrot.lane.b32.xlu0 %v388, 112
          %v447 = vpop.permute.xlu0 %446
          %s450 = scalar_lea.vmem [#allocation2], 32
          %451 = vst.msk [vmem:[%s450] sm:$0xff] %vm417, %v445
          %452 = vst.msk [vmem:[%s450 + $0x8] sm:$0xff] %vm417, %v447
          %453 = vrot.lane.b32.xlu0 %v412, 112
          %v454 = vpop.permute.xlu0 %453
          %455 = vrot.lane.b32.xlu0 %v415, 112
          %v456 = vpop.permute.xlu0 %455
          %s459 = scalar_lea.vmem [#allocation3], 32
          %460 = vst.msk [vmem:[%s459] sm:$0xff] %vm417, %v454
          %461 = vst.msk [vmem:[%s459 + $0x8] sm:$0xff] %vm417, %v456
          %462 = vrot.lane.b32.xlu0 %v385, 104
          %v463 = vpop.permute.xlu0 %462
          %464 = vrot.lane.b32.xlu0 %v388, 104
          %v465 = vpop.permute.xlu0 %464
          %s468 = scalar_lea.vmem [#allocation2], 48
          %469 = vst.msk [vmem:[%s468] sm:$0xff] %vm417, %v463
          %470 = vst.msk [vmem:[%s468 + $0x8] sm:$0xff] %vm417, %v465
          %471 = vrot.lane.b32.xlu0 %v412, 104
          %v472 = vpop.permute.xlu0 %471
          %473 = vrot.lane.b32.xlu0 %v415, 104
          %v474 = vpop.permute.xlu0 %473
          %s477 = scalar_lea.vmem [#allocation3], 48
          %478 = vst.msk [vmem:[%s477] sm:$0xff] %vm417, %v472
          %479 = vst.msk [vmem:[%s477 + $0x8] sm:$0xff] %vm417, %v474
        $region64: #{tpu_custom_call.1} parent=39 // pred_fallthru
          _
        %v480 = vld [vmem:[%s292] sm:$0xff]
        %v481 = vld [vmem:[#allocation11] sm:$0xff]
        %v482 = vld [vmem:[#allocation11 + $0x8] sm:$0xff]
        %v483 = vld [vmem:[#allocation11 + $0x10] sm:$0xff]
        %v484 = vld [vmem:[#allocation11 + $0x18] sm:$0xff]
        %vm485 = vcmask 261120
        %v487 = vsel %vm485, %v480, 0
        %489 = vmatpush.msra.mxu0 0.0
        %490 = vmatpush.msra.mxu0 0.0
        %491 = vmatpush.msra.mxu0 0.0
        %492 = vmatpush.msra.mxu0 0.0
        %493 = vmatpush.msra.mxu0 0.0
        %494 = vmatpush.msra.mxu0 0.0
        %495 = vmatpush.msra.mxu0 0.0
        %496 = vmatpush.msra.mxu0 0.0
        %497 = vmatpush.msra.mxu0 0.0
        %498 = vmatpush.msra.mxu0 0.0
        %499 = vmatpush.msra.mxu0 0.0
        %500 = vmatpush.msra.mxu0 0.0
        %501 = vmatpush.msra.mxu0 %v484
        %502 = vmatpush.msra.mxu0 %v483
        %503 = vmatpush.msra.mxu0 %v482
        %504 = vmatpush.msra.mxu0 %v481
        %505 = vmatmul.f32.gmra.mxu0 %v487
        %v506 = vpop.f32.mrf.mxu0
        %v507 = vadd.f32 0.0, %v506
        %508 = vdwg.mxu0
        %v509 = vmul.f32 %v507, 0.35355338
        %vm510 = vcmask 64512
        %511 = vst.msk [vmem:[#allocation4] sm:$0xff] %vm510, %v509
        %513 = vrot.lane.b32.xlu0 %v509, 120
        %v514 = vpop.permute.xlu0 %513
        %s516 = scalar_lea.vmem [#allocation4], 8
        %517 = vst.msk [vmem:[%s516] sm:$0xff] %vm510, %v514
        %518 = vrot.lane.b32.xlu0 %v509, 112
        %v519 = vpop.permute.xlu0 %518
        %s521 = scalar_lea.vmem [#allocation4], 16
        %522 = vst.msk [vmem:[%s521] sm:$0xff] %vm510, %v519
        %523 = vrot.lane.b32.xlu0 %v509, 104
        %v524 = vpop.permute.xlu0 %523
        %s526 = scalar_lea.vmem [#allocation4], 24
        %527 = vst.msk [vmem:[%s526] sm:$0xff] %vm510, %v524
        %v528 = vld [vmem:[#allocation4] sm:$0xff]
        %v529 = vld [vmem:[#allocation4 + $0x8] sm:$0xff]
        %v530 = vld [vmem:[#allocation4 + $0x10] sm:$0xff]
        %v531 = vld [vmem:[#allocation4 + $0x18] sm:$0xff]
        %v532 = vld [vmem:[#allocation2] sm:$0xff]
        %v533 = vld [vmem:[#allocation2 + $0x8] sm:$0xff]
        %v534 = vld [vmem:[#allocation2 + $0x10] sm:$0xff]
        %v535 = vld [vmem:[#allocation2 + $0x18] sm:$0xff]
        %v536 = vld [vmem:[#allocation2 + $0x20] sm:$0xff]
        %v537 = vld [vmem:[#allocation2 + $0x28] sm:$0xff]
        %v538 = vld [vmem:[#allocation2 + $0x30] sm:$0xff]
        %v539 = vld [vmem:[#allocation2 + $0x38] sm:$0xff]
        %v541 = vsel %vm510, %v528, 0
        %v544 = vsel %vm510, %v532, 0
        %v547 = vsel %vm510, %v533, 0
        %549 = vmatpush.xpose.msra.mxu0 0.0
        %550 = vmatpush.xpose.msra.mxu0 0.0
        %551 = vmatpush.xpose.msra.mxu0 0.0
        %552 = vmatpush.xpose.msra.mxu0 0.0
        %553 = vmatpush.xpose.msra.mxu0 0.0
        %554 = vmatpush.xpose.msra.mxu0 0.0
        %555 = vmatpush.xpose.msra.mxu0 0.0
        %556 = vmatpush.xpose.msra.mxu0 0.0
        %557 = vmatpush.xpose.msra.mxu0 0.0
        %558 = vmatpush.xpose.msra.mxu0 0.0
        %559 = vmatpush.xpose.msra.mxu0 0.0
        %560 = vmatpush.xpose.msra.mxu0 0.0
        %561 = vmatpush.xpose.msra.mxu0 0.0
        %562 = vmatpush.xpose.msra.mxu0 0.0
        %563 = vmatpush.xpose.msra.mxu0 %v547
        %564 = vmatpush.xpose.msra.mxu0 %v544
        %565 = vmatmul.f32.gmra.mxu0 %v541
        %v566 = vpop.f32.mrf.mxu0
        %v567 = vadd.f32 0.0, %v566
        %568 = vdwg.mxu0
        %v570 = vsel %vm510, %v529, 0
        %v573 = vsel %vm510, %v534, 0
        %v576 = vsel %vm510, %v535, 0
        %578 = vmatpush.xpose.msra.mxu0 0.0
        %579 = vmatpush.xpose.msra.mxu0 0.0
        %580 = vmatpush.xpose.msra.mxu0 0.0
        %581 = vmatpush.xpose.msra.mxu0 0.0
        %582 = vmatpush.xpose.msra.mxu0 0.0
        %583 = vmatpush.xpose.msra.mxu0 0.0
        %584 = vmatpush.xpose.msra.mxu0 0.0
        %585 = vmatpush.xpose.msra.mxu0 0.0
        %586 = vmatpush.xpose.msra.mxu0 0.0
        %587 = vmatpush.xpose.msra.mxu0 0.0
        %588 = vmatpush.xpose.msra.mxu0 0.0
        %589 = vmatpush.xpose.msra.mxu0 0.0
        %590 = vmatpush.xpose.msra.mxu0 0.0
        %591 = vmatpush.xpose.msra.mxu0 0.0
        %592 = vmatpush.xpose.msra.mxu0 %v576
        %593 = vmatpush.xpose.msra.mxu0 %v573
        %594 = vmatmul.f32.gmra.mxu0 %v570
        %v595 = vpop.f32.mrf.mxu0
        %v596 = vadd.f32 0.0, %v595
        %597 = vdwg.mxu0
        %v599 = vsel %vm510, %v530, 0
        %v602 = vsel %vm510, %v536, 0
        %v605 = vsel %vm510, %v537, 0
        %607 = vmatpush.xpose.msra.mxu0 0.0
        %608 = vmatpush.xpose.msra.mxu0 0.0
        %609 = vmatpush.xpose.msra.mxu0 0.0
        %610 = vmatpush.xpose.msra.mxu0 0.0
        %611 = vmatpush.xpose.msra.mxu0 0.0
        %612 = vmatpush.xpose.msra.mxu0 0.0
        %613 = vmatpush.xpose.msra.mxu0 0.0
        %614 = vmatpush.xpose.msra.mxu0 0.0
        %615 = vmatpush.xpose.msra.mxu0 0.0
        %616 = vmatpush.xpose.msra.mxu0 0.0
        %617 = vmatpush.xpose.msra.mxu0 0.0
        %618 = vmatpush.xpose.msra.mxu0 0.0
        %619 = vmatpush.xpose.msra.mxu0 0.0
        %620 = vmatpush.xpose.msra.mxu0 0.0
        %621 = vmatpush.xpose.msra.mxu0 %v605
        %622 = vmatpush.xpose.msra.mxu0 %v602
        %623 = vmatmul.f32.gmra.mxu0 %v599
        %v624 = vpop.f32.mrf.mxu0
        %v625 = vadd.f32 0.0, %v624
        %626 = vdwg.mxu0
        %v628 = vsel %vm510, %v531, 0
        %v631 = vsel %vm510, %v538, 0
        %v634 = vsel %vm510, %v539, 0
        %636 = vmatpush.xpose.msra.mxu0 0.0
        %637 = vmatpush.xpose.msra.mxu0 0.0
        %638 = vmatpush.xpose.msra.mxu0 0.0
        %639 = vmatpush.xpose.msra.mxu0 0.0
        %640 = vmatpush.xpose.msra.mxu0 0.0
        %641 = vmatpush.xpose.msra.mxu0 0.0
        %642 = vmatpush.xpose.msra.mxu0 0.0
        %643 = vmatpush.xpose.msra.mxu0 0.0
        %644 = vmatpush.xpose.msra.mxu0 0.0
        %645 = vmatpush.xpose.msra.mxu0 0.0
        %646 = vmatpush.xpose.msra.mxu0 0.0
        %647 = vmatpush.xpose.msra.mxu0 0.0
        %648 = vmatpush.xpose.msra.mxu0 0.0
        %649 = vmatpush.xpose.msra.mxu0 0.0
        %650 = vmatpush.xpose.msra.mxu0 %v634
        %651 = vmatpush.xpose.msra.mxu0 %v631
        %652 = vmatmul.f32.gmra.mxu0 %v628
        %v653 = vpop.f32.mrf.mxu0
        %v654 = vadd.f32 0.0, %v653
        %655 = vdwg.mxu0
        %vm656 = vcmask 130048
        %v657 = vsel %vm656, %v567, -inf
        %658 = vmax.xlane.f32.xlu0 %v657
        %v659 = vpop.xlane.xlu0 %658
        %v660 = vsel %vm656, %v596, -inf
        %661 = vmax.xlane.f32.xlu0 %v660
        %v662 = vpop.xlane.xlu0 %661
        %v663 = vsel %vm656, %v625, -inf
        %664 = vmax.xlane.f32.xlu0 %v663
        %v665 = vpop.xlane.xlu0 %664
        %v666 = vsel %vm656, %v654, -inf
        %667 = vmax.xlane.f32.xlu0 %v666
        %v668 = vpop.xlane.xlu0 %667
        %v669 = vsub.f32 %v567, %v659
        %v670 = vsub.f32 %v596, %v662
        %v671 = vsub.f32 %v625, %v665
        %v672 = vsub.f32 %v654, %v668
        %v673 = vmul.f32 %v669, 1.442695
        %v674 = vpow.pop %v673
        %v675 = vmul.f32 %v670, 1.442695
        %v676 = vpow.pop %v675
        %v677 = vmul.f32 %v671, 1.442695
        %v678 = vpow.pop %v677
        %v679 = vmul.f32 %v672, 1.442695
        %v680 = vpow.pop %v679
        %v681 = vsel %vm656, %v674, 0.0
        %682 = vadd.xlane.f32.xlu0 %v681
        %v683 = vpop.xlane.xlu0 %682
        %v684 = vsel %vm656, %v676, 0.0
        %685 = vadd.xlane.f32.xlu0 %v684
        %v686 = vpop.xlane.xlu0 %685
        %v687 = vsel %vm656, %v678, 0.0
        %688 = vadd.xlane.f32.xlu0 %v687
        %v689 = vpop.xlane.xlu0 %688
        %v690 = vsel %vm656, %v680, 0.0
        %691 = vadd.xlane.f32.xlu0 %v690
        %v692 = vpop.xlane.xlu0 %691
        %v693 = vrcp.pop %v683
        %v694 = vrcp.pop %v686
        %v695 = vrcp.pop %v689
        %v696 = vrcp.pop %v692
        %v697 = vmul.f32 %v674, %v693
        %v698 = vmul.f32 %v676, %v694
        %v699 = vmul.f32 %v678, %v695
        %v700 = vmul.f32 %v680, %v696
        %v701 = vld [vmem:[#allocation3] sm:$0xff]
        %v702 = vld [vmem:[#allocation3 + $0x8] sm:$0xff]
        %v703 = vld [vmem:[#allocation3 + $0x10] sm:$0xff]
        %v704 = vld [vmem:[#allocation3 + $0x18] sm:$0xff]
        %v705 = vld [vmem:[#allocation3 + $0x20] sm:$0xff]
        %v706 = vld [vmem:[#allocation3 + $0x28] sm:$0xff]
        %v707 = vld [vmem:[#allocation3 + $0x30] sm:$0xff]
        %v708 = vld [vmem:[#allocation3 + $0x38] sm:$0xff]
        %v710 = vsel %vm656, %v697, 0
        %712 = vmatpush.msra.mxu0 0.0
        %713 = vmatpush.msra.mxu0 0.0
        %714 = vmatpush.msra.mxu0 0.0
        %715 = vmatpush.msra.mxu0 0.0
        %716 = vmatpush.msra.mxu0 0.0
        %717 = vmatpush.msra.mxu0 0.0
        %718 = vmatpush.msra.mxu0 0.0
        %719 = vmatpush.msra.mxu0 0.0
        %720 = vmatpush.msra.mxu0 0.0
        %721 = vmatpush.msra.mxu0 0.0
        %722 = vmatpush.msra.mxu0 0.0
        %723 = vmatpush.msra.mxu0 0.0
        %724 = vmatpush.msra.mxu0 0.0
        %725 = vmatpush.msra.mxu0 0.0
        %726 = vmatpush.msra.mxu0 %v702
        %727 = vmatpush.msra.mxu0 %v701
        %728 = vmatmul.f32.gmra.mxu0 %v710
        %v729 = vpop.f32.mrf.mxu0
        %v730 = vadd.f32 0.0, %v729
        %731 = vdwg.mxu0
        %v733 = vsel %vm656, %v698, 0
        %735 = vmatpush.msra.mxu0 0.0
        %736 = vmatpush.msra.mxu0 0.0
        %737 = vmatpush.msra.mxu0 0.0
        %738 = vmatpush.msra.mxu0 0.0
        %739 = vmatpush.msra.mxu0 0.0
        %740 = vmatpush.msra.mxu0 0.0
        %741 = vmatpush.msra.mxu0 0.0
        %742 = vmatpush.msra.mxu0 0.0
        %743 = vmatpush.msra.mxu0 0.0
        %744 = vmatpush.msra.mxu0 0.0
        %745 = vmatpush.msra.mxu0 0.0
        %746 = vmatpush.msra.mxu0 0.0
        %747 = vmatpush.msra.mxu0 0.0
        %748 = vmatpush.msra.mxu0 0.0
        %749 = vmatpush.msra.mxu0 %v704
        %750 = vmatpush.msra.mxu0 %v703
        %751 = vmatmul.f32.gmra.mxu0 %v733
        %v752 = vpop.f32.mrf.mxu0
        %v753 = vadd.f32 0.0, %v752
        %754 = vdwg.mxu0
        %v756 = vsel %vm656, %v699, 0
        %758 = vmatpush.msra.mxu0 0.0
        %759 = vmatpush.msra.mxu0 0.0
        %760 = vmatpush.msra.mxu0 0.0
        %761 = vmatpush.msra.mxu0 0.0
        %762 = vmatpush.msra.mxu0 0.0
        %763 = vmatpush.msra.mxu0 0.0
        %764 = vmatpush.msra.mxu0 0.0
        %765 = vmatpush.msra.mxu0 0.0
        %766 = vmatpush.msra.mxu0 0.0
        %767 = vmatpush.msra.mxu0 0.0
        %768 = vmatpush.msra.mxu0 0.0
        %769 = vmatpush.msra.mxu0 0.0
        %770 = vmatpush.msra.mxu0 0.0
        %771 = vmatpush.msra.mxu0 0.0
        %772 = vmatpush.msra.mxu0 %v706
        %773 = vmatpush.msra.mxu0 %v705
        %774 = vmatmul.f32.gmra.mxu0 %v756
        %v775 = vpop.f32.mrf.mxu0
        %v776 = vadd.f32 0.0, %v775
        %777 = vdwg.mxu0
        %v779 = vsel %vm656, %v700, 0
        %781 = vmatpush.msra.mxu0 0.0
        %782 = vmatpush.msra.mxu0 0.0
        %783 = vmatpush.msra.mxu0 0.0
        %784 = vmatpush.msra.mxu0 0.0
        %785 = vmatpush.msra.mxu0 0.0
        %786 = vmatpush.msra.mxu0 0.0
        %787 = vmatpush.msra.mxu0 0.0
        %788 = vmatpush.msra.mxu0 0.0
        %789 = vmatpush.msra.mxu0 0.0
        %790 = vmatpush.msra.mxu0 0.0
        %791 = vmatpush.msra.mxu0 0.0
        %792 = vmatpush.msra.mxu0 0.0
        %793 = vmatpush.msra.mxu0 0.0
        %794 = vmatpush.msra.mxu0 0.0
        %795 = vmatpush.msra.mxu0 %v708
        %796 = vmatpush.msra.mxu0 %v707
        %797 = vmatmul.f32.gmra.mxu0 %v779
        %v798 = vpop.f32.mrf.mxu0
        %v799 = vadd.f32 0.0, %v798
        %800 = vdwg.mxu0
        %801 = vst.msk [vmem:[#allocation5] sm:$0xff] %vm510, %v730
        %803 = vrot.lane.b32.xlu0 %v753, 8
        %v804 = vpop.permute.xlu0 %803
        %vm806 = vcmask 130112
        %807 = vst.msk [vmem:[#allocation5] sm:$0xff] %vm806, %v804
        %809 = vrot.lane.b32.xlu0 %v776, 16
        %v810 = vpop.permute.xlu0 %809
        %vm812 = vcmask 195712
        %813 = vst.msk [vmem:[#allocation5] sm:$0xff] %vm812, %v810
        %815 = vrot.lane.b32.xlu0 %v799, 24
        %v816 = vpop.permute.xlu0 %815
        %vm818 = vcmask 261312
        %819 = vst.msk [vmem:[#allocation5] sm:$0xff] %vm818, %v816
        %v820 = vld [vmem:[#allocation5] sm:$0xff]
        %821 = vst.msk [vmem:[%s349] sm:$0xff] %vm485, %v820
        %s822 = sand.u32 %s165, 1
        %s823 = scalar_lea.sflag [#allocation8], %s822
        %s824 = sand.u32 %s165, 1
        %s825 = smul.addr %s824, 8
        %s826 = scalar_lea.vmem [#allocation15], %s825
        // Predicated region
        $region65: #{tpu_custom_call.1} parent=39 // pred_check
          %p827 = pneg %p175
        $region66: #{tpu_custom_call.1} parent=39 // pred_check_branch
          %829 = sbr.rel (%p827) target = $region68
        $region67: #{tpu_custom_call.1} parent=39 // pred_region
          %831 = vsyncadd %s823, 0
          %s832 = sadd.s32 %s31, %s30
          %s833 = smul.addr %s832, 8
          %s834 = scalar_lea.hbm %s5, %s833
          %s836 = sshll.u32 %s826, 4
          %s837 = int_to_ptr.vmem [resolvable:$true] %s836
          %s838 = sshll.u32 %s834, 4
          %s839 = int_to_ptr.hbm [resolvable:$true] %s838
          %841 = dma.vmem_to_hbm [thread:$0]  %s837, 128, %s839, %s823
        $region68: #{tpu_custom_call.1} parent=39 // pred_fallthru
          _
      $region40: #{tpu_custom_call.1} parent=5 // pred_fallthru
        _
      %p842 = scmp.le.s32.totalorder 2, %s21
      // Predicated region
      $region69: #{tpu_custom_call.1} parent=5 // pred_check
        %p843 = pneg %p842
      $region70: #{tpu_custom_call.1} parent=5 // pred_check_branch
        %845 = sbr.rel (%p843) target = $region72
      $region71: #{tpu_custom_call.1} parent=5 // pred_region
        %s846 = ssub.s32 %s21, 2
        // Predicated region
        $region73: #{tpu_custom_call.1} parent=71 // pred_check
          %p847 = pneg %p181
        $region74: #{tpu_custom_call.1} parent=71 // pred_check_branch
          %849 = sbr.rel (%p847) target = $region76
        $region75: #{tpu_custom_call.1} parent=71 // pred_region
          %s850 = sand.u32 %s166, 1
          %s851 = scalar_lea.sflag [#allocation8], %s850
          %s852 = sand.u32 %s166, 1
          %s853 = smul.addr %s852, 8
          %s854 = scalar_lea.vmem [#allocation15], %s853
          %856 = dma.done %s851, 128
        $region76: #{tpu_custom_call.1} parent=71 // pred_fallthru
          _
      $region72: #{tpu_custom_call.1} parent=5 // pred_fallthru
        _
    $region6: #{tpu_custom_call.1} parent=1 // loop_footer
      %s25 = sadd.s32 1, %s21
    $region7: #{tpu_custom_call.1} parent=1 // loop_footer_branch
      %20 = sbr.rel target = $region3
    $region8: #{tpu_custom_call.1} parent=1 // loop_exit
      _
    %857 = vsyncpa [#allocation7], 1
    %s858 = scalar_lea.sflag [#allocation7], 1
    %859 = vsyncpa %s858, 1
    %860 = vsyncpa [#allocation10], 1
    %s861 = scalar_lea.sflag [#allocation10], 1
    %862 = vsyncpa %s861, 1
    %863 = vsyncpa [#allocation13], 1
    %864 = vsyncpa [#allocation8], 1
    %s865 = scalar_lea.sflag [#allocation8], 1
    %866 = vsyncpa %s865, 1

</llo_original>
